<compile_context>
chip_gen: v7x
topology: tpu7x:2x2x1
jax: 0.10.0
libtpu: 0.0.40
codegen_flags: <defaults>
</compile_context>

<pallas_src>
import jax
import jax.numpy as jnp
from jax.experimental import pallas as pl
from jax.experimental.pallas import tpu as pltpu

HIDDEN_DIM = 32    # logical hidden width of the module
LANE_PAD = 128     # lane-dense padded width for hidden dims
OUT_DIM = 2        # real output width
TM_MAX = 1024      # max rows per grid step


def _mlp_kernel(x_ref, pred_ref, w1a_ref, w1b_ref, b1_ref,
                w2_ref, b2_ref, w3_ref, b3_ref, o_ref):
    """Fused 3-layer MLP on one row-block; all weights resident in VMEM.

    Layer 1 realizes torch.cat((x, pred), dim=1) @ W1 + b1 as 4 VPU
    broadcast-FMAs (no concat, no K=2 MXU dot).  Layers 2/3 use bf16 MXU
    operands with f32 accumulation; bias/ReLU stay f32 on the VPU.
    Hidden dims are zero-padded to 128 lanes (exact padding).
    """
    x = x_ref[...]                                                   # (TM, 2) f32
    p = pred_ref[...]                                                # (TM, 2) f32

    # ---- Layer 1 (VPU): h = x @ W1[:2] + pred @ W1[2:] + b1 -------------
    h = (x[:, 0:1] * w1a_ref[0:1, :]
         + x[:, 1:2] * w1a_ref[1:2, :]
         + p[:, 0:1] * w1b_ref[0:1, :]
         + p[:, 1:2] * w1b_ref[1:2, :]
         + b1_ref[...])                                              # (TM, 128) f32
    h = jnp.maximum(h, 0.0)

    # ---- Layer 2 (MXU, bf16 operands, f32 accumulation) ------------------
    h = jnp.dot(h.astype(jnp.bfloat16), w2_ref[...],
                preferred_element_type=jnp.float32) + b2_ref[...]
    h = jnp.maximum(h, 0.0)                                          # (TM, 128) f32

    # ---- Layer 3 (MXU) + narrow store ------------------------------------
    out = jnp.dot(h.astype(jnp.bfloat16), w3_ref[...],
                  preferred_element_type=jnp.float32) + b3_ref[...]  # (TM, 128) f32
    o_ref[...] = out[:, :OUT_DIM]                                    # (TM, 2) store


def _choose_block_rows(batch):
    """Large row tile, multiple of 8, with >= 2 grid steps once B >= 16."""
    if batch <= 16:
        return batch                       # single block == full array dims (legal)
    tm = min(TM_MAX, (batch + 1) // 2)     # cap at ~B/2 -> at least 2 grid steps
    return max(8, (tm // 8) * 8)


def classifier_mlp_forward(x, pred, kernel_params):
    """Batched forward. x: (B, 2) f32, pred: (B, 2) f32 (output of external ddt).

    Returns (B, 2) f32 with the same per-row semantics as the PyTorch module
    (layers 2/3 use bf16 MXU operands, f32 accumulation).
    """
    w1a, w1b, b1, w2, b2, w3, b3 = kernel_params
    B = x.shape[0]

    tm = _choose_block_rows(B)
    grid = (pl.cdiv(B, tm),)

    row_in = pl.BlockSpec((tm, 2), lambda i: (i, 0))
    row_out = pl.BlockSpec((tm, OUT_DIM), lambda i: (i, 0))
    const = lambda shape: pl.BlockSpec(shape, lambda i: (0, 0))  # resident weight block

    return pl.pallas_call(
        _mlp_kernel,
        out_shape=jax.ShapeDtypeStruct((B, OUT_DIM), jnp.float32),
        grid=grid,
        in_specs=[
            row_in,                      # x      (TM, 2)   f32
            row_in,                      # pred   (TM, 2)   f32
            const((2, LANE_PAD)),        # W1[:2] (x rows)   f32
            const((2, LANE_PAD)),        # W1[2:] (pred rows) f32
            const((1, LANE_PAD)),        # b1                f32
            const((LANE_PAD, LANE_PAD)), # W2                bf16
            const((1, LANE_PAD)),        # b2                f32
            const((LANE_PAD, LANE_PAD)), # W3                bf16
            const((1, LANE_PAD)),        # b3                f32
        ],
        out_specs=row_out,
        compiler_params=pltpu.CompilerParams(
            dimension_semantics=("parallel",)),
    )(x, pred, w1a, w1b, b1, w2, b2, w3, b3)


def init_params(key, hidden_dim=HIDDEN_DIM):
    """Logical (unpadded) params mimicking nn.Linear's U(-1/sqrt(fan_in), .) init.

    Weights are stored [in, out] so x @ W + b == torch's x @ W.T + b.
    """
    def linear(k, fan_in, fan_out):
        kw, kb = jax.random.split(k)
        bound = 1.0 / jnp.sqrt(jnp.float32(fan_in))
        w = jax.random.uniform(kw, (fan_in, fan_out), jnp.float32, -bound, bound)
        b = jax.random.uniform(kb, (1, fan_out), jnp.float32, -bound, bound)
        return w, b

    k1, k2, k3 = jax.random.split(key, 3)
    w1, b1 = linear(k1, 4, hidden_dim)            # h1 : Linear(4, hidden)
    w2, b2 = linear(k2, hidden_dim, hidden_dim)   # h2 : Linear(hidden, hidden)
    w3, b3 = linear(k3, hidden_dim, 2)            # out: Linear(hidden, 2)
    return (w1, b1, w2, b2, w3, b3)


def pack_params_for_kernel(params, pad=LANE_PAD):
    """Split W1 (kills the concat), zero-pad hidden dims to 128 lanes, and cast
    the MXU weights (W2, W3) to bf16.  Done once; padding is exact (zeros)."""
    w1, b1, w2, b2, w3, b3 = params

    def pad_to(a, rows, cols, dtype=jnp.float32):
        out = jnp.zeros((rows, cols), dtype)
        return out.at[: a.shape[0], : a.shape[1]].set(a.astype(dtype))

    w1a = pad_to(w1[:2, :], 2, pad)                    # rows matching x    (2, 128) f32
    w1b = pad_to(w1[2:, :], 2, pad)                    # rows matching pred (2, 128) f32
    b1p = pad_to(b1, 1, pad)                           # (1, 128) f32
    w2p = pad_to(w2, pad, pad, jnp.bfloat16)           # (128, 128) bf16
    b2p = pad_to(b2, 1, pad)                           # (1, 128) f32
    w3p = pad_to(w3, pad, pad, jnp.bfloat16)           # (128, 128) bf16
    b3p = pad_to(b3, 1, pad)                           # (1, 128) f32
    return (w1a, w1b, b1p, w2p, b2p, w3p, b3p)


def reference_forward(x, pred, params):
    """Pure-JAX reference with the same bf16-operand / f32-accumulate recipe."""
    w1, b1, w2, b2, w3, b3 = params
    xcat = jnp.concatenate([x, pred], axis=1)                       # (B, 4)
    h = jnp.maximum(xcat @ w1 + b1, 0.0)                            # f32 layer 1
    h = jnp.maximum(
        jnp.dot(h.astype(jnp.bfloat16), w2.astype(jnp.bfloat16),
                preferred_element_type=jnp.float32) + b2, 0.0)
    return (jnp.dot(h.astype(jnp.bfloat16), w3.astype(jnp.bfloat16),
                    preferred_element_type=jnp.float32) + b3)


if __name__ == "__main__":
    key = jax.random.PRNGKey(0)
    k_params, k_data = jax.random.split(key)

    params = init_params(k_params)                  # logical params (reference)
    kernel_params = pack_params_for_kernel(params)  # split + padded + bf16 (kernel)

    fwd = jax.jit(classifier_mlp_forward)

    # B=8: tiny-batch path (single block); B=40: multi-step cdiv grid with a
    # ragged last block (exercises masking + the "parallel" row axis).
    for B in (8, 40):
        kx, kp = jax.random.split(jax.random.fold_in(k_data, B))
        x = jax.random.normal(kx, (B, 2), jnp.float32)
        pred = jax.random.normal(kp, (B, 2), jnp.float32)  # surrogate for ddt(x)

        out = jax.block_until_ready(fwd(x, pred, kernel_params))
        ref = reference_forward(x, pred, params)

        assert out.shape == (B, 2)
        max_err = float(jnp.max(jnp.abs(out - ref)))
        assert jnp.allclose(out, ref, atol=1e-2, rtol=1e-2), (
            f"B={B}: max abs err {max_err}")

    print("KERNEL_OK")
</pallas_src>

<mosaic_0001>
module attributes {stable_mosaic.version = 11 : i64} {
  func.func @_mlp_kernel(%arg0: i32, %arg1: memref<8x2xf32, #tpu.memory_space<vmem>>, %arg2: memref<8x2xf32, #tpu.memory_space<vmem>>, %arg3: memref<2x128xf32, #tpu.memory_space<vmem>>, %arg4: memref<2x128xf32, #tpu.memory_space<vmem>>, %arg5: memref<1x128xf32, #tpu.memory_space<vmem>>, %arg6: memref<128x128xbf16, #tpu.memory_space<vmem>>, %arg7: memref<1x128xf32, #tpu.memory_space<vmem>>, %arg8: memref<128x128xbf16, #tpu.memory_space<vmem>>, %arg9: memref<1x128xf32, #tpu.memory_space<vmem>>, %arg10: memref<8x2xf32, #tpu.memory_space<vmem>>) attributes {dimension_semantics = [#tpu.dimension_semantics<parallel>], iteration_bounds = array<i64: 1>, scalar_prefetch = 0 : i64, scratch_operands = 0 : i64, tpu.core_type = #tpu.core_type<tc>, window_params = [{transform_indices = @transform_0, window_bounds = array<i64: 8, 2>}, {transform_indices = @transform_1, window_bounds = array<i64: 8, 2>}, {pipeline_mode = #tpu.pipeline_mode<synchronous>, transform_indices = @transform_2, window_bounds = array<i64: 2, 128>}, {pipeline_mode = #tpu.pipeline_mode<synchronous>, transform_indices = @transform_3, window_bounds = array<i64: 2, 128>}, {pipeline_mode = #tpu.pipeline_mode<synchronous>, transform_indices = @transform_4, window_bounds = array<i64: 1, 128>}, {pipeline_mode = #tpu.pipeline_mode<synchronous>, transform_indices = @transform_5, window_bounds = array<i64: 128, 128>}, {pipeline_mode = #tpu.pipeline_mode<synchronous>, transform_indices = @transform_6, window_bounds = array<i64: 1, 128>}, {pipeline_mode = #tpu.pipeline_mode<synchronous>, transform_indices = @transform_7, window_bounds = array<i64: 128, 128>}, {pipeline_mode = #tpu.pipeline_mode<synchronous>, transform_indices = @transform_8, window_bounds = array<i64: 1, 128>}, {transform_indices = @transform_9, window_bounds = array<i64: 8, 2>}]} {
    %c0 = arith.constant 0 : index
    %c0_0 = arith.constant 0 : index
    %0 = vector.load %arg1[%c0, %c0_0] : memref<8x2xf32, #tpu.memory_space<vmem>>, vector<8x2xf32>
    %c0_1 = arith.constant 0 : index
    %c0_2 = arith.constant 0 : index
    %1 = vector.load %arg2[%c0_1, %c0_2] : memref<8x2xf32, #tpu.memory_space<vmem>>, vector<8x2xf32>
    %2 = vector.extract_strided_slice %0 {offsets = [0, 0], sizes = [8, 1], strides = [1, 1]} : vector<8x2xf32> to vector<8x1xf32>
    %c0_3 = arith.constant 0 : index
    %c0_4 = arith.constant 0 : index
    %3 = vector.load %arg3[%c0_3, %c0_4] : memref<2x128xf32, #tpu.memory_space<vmem>>, vector<1x128xf32>
    %4 = vector.broadcast %2 : vector<8x1xf32> to vector<8x128xf32>
    %5 = vector.broadcast %3 : vector<1x128xf32> to vector<8x128xf32>
    %6 = arith.mulf %4, %5 : vector<8x128xf32>
    %7 = vector.extract_strided_slice %0 {offsets = [0, 1], sizes = [8, 1], strides = [1, 1]} : vector<8x2xf32> to vector<8x1xf32>
    %c1 = arith.constant 1 : index
    %c0_5 = arith.constant 0 : index
    %8 = vector.load %arg3[%c1, %c0_5] : memref<2x128xf32, #tpu.memory_space<vmem>>, vector<1x128xf32>
    %9 = vector.broadcast %7 : vector<8x1xf32> to vector<8x128xf32>
    %10 = vector.broadcast %8 : vector<1x128xf32> to vector<8x128xf32>
    %11 = arith.mulf %9, %10 : vector<8x128xf32>
    %12 = arith.addf %6, %11 : vector<8x128xf32>
    %13 = vector.extract_strided_slice %1 {offsets = [0, 0], sizes = [8, 1], strides = [1, 1]} : vector<8x2xf32> to vector<8x1xf32>
    %c0_6 = arith.constant 0 : index
    %c0_7 = arith.constant 0 : index
    %14 = vector.load %arg4[%c0_6, %c0_7] : memref<2x128xf32, #tpu.memory_space<vmem>>, vector<1x128xf32>
    %15 = vector.broadcast %13 : vector<8x1xf32> to vector<8x128xf32>
    %16 = vector.broadcast %14 : vector<1x128xf32> to vector<8x128xf32>
    %17 = arith.mulf %15, %16 : vector<8x128xf32>
    %18 = arith.addf %12, %17 : vector<8x128xf32>
    %19 = vector.extract_strided_slice %1 {offsets = [0, 1], sizes = [8, 1], strides = [1, 1]} : vector<8x2xf32> to vector<8x1xf32>
    %c1_8 = arith.constant 1 : index
    %c0_9 = arith.constant 0 : index
    %20 = vector.load %arg4[%c1_8, %c0_9] : memref<2x128xf32, #tpu.memory_space<vmem>>, vector<1x128xf32>
    %21 = vector.broadcast %19 : vector<8x1xf32> to vector<8x128xf32>
    %22 = vector.broadcast %20 : vector<1x128xf32> to vector<8x128xf32>
    %23 = arith.mulf %21, %22 : vector<8x128xf32>
    %24 = arith.addf %18, %23 : vector<8x128xf32>
    %c0_10 = arith.constant 0 : index
    %c0_11 = arith.constant 0 : index
    %25 = vector.load %arg5[%c0_10, %c0_11] : memref<1x128xf32, #tpu.memory_space<vmem>>, vector<1x128xf32>
    %26 = vector.broadcast %25 : vector<1x128xf32> to vector<8x128xf32>
    %27 = arith.addf %24, %26 : vector<8x128xf32>
    %cst = arith.constant 0.000000e+00 : f32
    %28 = vector.broadcast %cst : f32 to vector<8x128xf32>
    %29 = arith.maximumf %27, %28 : vector<8x128xf32>
    %30 = arith.truncf %29 : vector<8x128xf32> to vector<8x128xbf16>
    %c0_12 = arith.constant 0 : index
    %c0_13 = arith.constant 0 : index
    %31 = vector.load %arg6[%c0_12, %c0_13] : memref<128x128xbf16, #tpu.memory_space<vmem>>, vector<128x128xbf16>
    %cst_14 = arith.constant dense<0.000000e+00> : vector<8x128xf32>
    %32 = tpu.matmul %30, %31, %cst_14 {dimension_numbers = #tpu.dot_dimension_numbers<[1], [0], [0], [1], [0, 0, 1, 1], [], []>} : vector<8x128xbf16>, vector<128x128xbf16>, vector<8x128xf32> -> vector<8x128xf32>
    %c0_15 = arith.constant 0 : index
    %c0_16 = arith.constant 0 : index
    %33 = vector.load %arg7[%c0_15, %c0_16] : memref<1x128xf32, #tpu.memory_space<vmem>>, vector<1x128xf32>
    %34 = vector.broadcast %33 : vector<1x128xf32> to vector<8x128xf32>
    %35 = arith.addf %32, %34 : vector<8x128xf32>
    %cst_17 = arith.constant 0.000000e+00 : f32
    %36 = vector.broadcast %cst_17 : f32 to vector<8x128xf32>
    %37 = arith.maximumf %35, %36 : vector<8x128xf32>
    %38 = arith.truncf %37 : vector<8x128xf32> to vector<8x128xbf16>
    %c0_18 = arith.constant 0 : index
    %c0_19 = arith.constant 0 : index
    %39 = vector.load %arg8[%c0_18, %c0_19] : memref<128x128xbf16, #tpu.memory_space<vmem>>, vector<128x128xbf16>
    %cst_20 = arith.constant dense<0.000000e+00> : vector<8x128xf32>
    %40 = tpu.matmul %38, %39, %cst_20 {dimension_numbers = #tpu.dot_dimension_numbers<[1], [0], [0], [1], [0, 0, 1, 1], [], []>} : vector<8x128xbf16>, vector<128x128xbf16>, vector<8x128xf32> -> vector<8x128xf32>
    %c0_21 = arith.constant 0 : index
    %c0_22 = arith.constant 0 : index
    %41 = vector.load %arg9[%c0_21, %c0_22] : memref<1x128xf32, #tpu.memory_space<vmem>>, vector<1x128xf32>
    %42 = vector.broadcast %41 : vector<1x128xf32> to vector<8x128xf32>
    %43 = arith.addf %40, %42 : vector<8x128xf32>
    %44 = vector.extract_strided_slice %43 {offsets = [0, 0], sizes = [8, 2], strides = [1, 1]} : vector<8x128xf32> to vector<8x2xf32>
    %c0_23 = arith.constant 0 : index
    %c0_24 = arith.constant 0 : index
    %45 = vector.load %arg10[%c0_23, %c0_24] : memref<8x2xf32, #tpu.memory_space<vmem>>, vector<8x2xf32>
    tpu.vector_store %arg10[%c0_23, %c0_24], %44 {strides = array<i32>} : memref<8x2xf32, #tpu.memory_space<vmem>>, vector<8x2xf32>,
    return
  }
  func.func @transform_0(%arg0: i32) -> (i32, i32) {
    %c0_i32 = arith.constant 0 : i32
    %c0_i32_0 = arith.constant 0 : i32
    return %arg0, %c0_i32 : i32, i32
  }
  func.func @transform_1(%arg0: i32) -> (i32, i32) {
    %c0_i32 = arith.constant 0 : i32
    %c0_i32_0 = arith.constant 0 : i32
    return %arg0, %c0_i32 : i32, i32
  }
  func.func @transform_2(%arg0: i32) -> (i32, i32) {
    %c0_i32 = arith.constant 0 : i32
    %c0_i32_0 = arith.constant 0 : i32
    %c0_i32_1 = arith.constant 0 : i32
    return %c0_i32, %c0_i32_0 : i32, i32
  }
  func.func @transform_3(%arg0: i32) -> (i32, i32) {
    %c0_i32 = arith.constant 0 : i32
    %c0_i32_0 = arith.constant 0 : i32
    %c0_i32_1 = arith.constant 0 : i32
    return %c0_i32, %c0_i32_0 : i32, i32
  }
  func.func @transform_4(%arg0: i32) -> (i32, i32) {
    %c0_i32 = arith.constant 0 : i32
    %c0_i32_0 = arith.constant 0 : i32
    %c0_i32_1 = arith.constant 0 : i32
    return %c0_i32, %c0_i32_0 : i32, i32
  }
  func.func @transform_5(%arg0: i32) -> (i32, i32) {
    %c0_i32 = arith.constant 0 : i32
    %c0_i32_0 = arith.constant 0 : i32
    %c0_i32_1 = arith.constant 0 : i32
    return %c0_i32, %c0_i32_0 : i32, i32
  }
  func.func @transform_6(%arg0: i32) -> (i32, i32) {
    %c0_i32 = arith.constant 0 : i32
    %c0_i32_0 = arith.constant 0 : i32
    %c0_i32_1 = arith.constant 0 : i32
    return %c0_i32, %c0_i32_0 : i32, i32
  }
  func.func @transform_7(%arg0: i32) -> (i32, i32) {
    %c0_i32 = arith.constant 0 : i32
    %c0_i32_0 = arith.constant 0 : i32
    %c0_i32_1 = arith.constant 0 : i32
    return %c0_i32, %c0_i32_0 : i32, i32
  }
  func.func @transform_8(%arg0: i32) -> (i32, i32) {
    %c0_i32 = arith.constant 0 : i32
    %c0_i32_0 = arith.constant 0 : i32
    %c0_i32_1 = arith.constant 0 : i32
    return %c0_i32, %c0_i32_0 : i32, i32
  }
  func.func @transform_9(%arg0: i32) -> (i32, i32) {
    %c0_i32 = arith.constant 0 : i32
    %c0_i32_0 = arith.constant 0 : i32
    return %arg0, %c0_i32 : i32, i32
  }
}

</mosaic_0001>

<llo_original>
// kernel: classifier_mlp_forward.1
$region0: #{classifier_mlp_forward.1}
  #allocation0 [shape = 'u32[]', space=smem, size = 0x4, offset = 0x4, fixed_abs, tag = 'smem constant byte address 0x4 - core index']
  #allocation1 [shape = 'u32[144,128]{1,0:T(1,128)}', space=vmem, size = 0x12000, scoped, tag = 'internal scratch']
  %s0 = inlined_call_operand.vmem [shape: f32[8,2], index: 0, kind: input, shape index: {}]
  %s1 = inlined_call_operand.vmem [shape: f32[8,2], index: 1, kind: input, shape index: {}]
  %s2 = inlined_call_operand.vmem [shape: f32[2,128], index: 2, kind: input, shape index: {}]
  %s3 = inlined_call_operand.vmem [shape: f32[2,128], index: 3, kind: input, shape index: {}]
  %s4 = inlined_call_operand.vmem [shape: f32[1,128], index: 4, kind: input, shape index: {}]
  %s5 = inlined_call_operand.hbm [shape: bf16[128,128], index: 5, kind: input, shape index: {}]
  %s6 = inlined_call_operand.vmem [shape: f32[1,128], index: 6, kind: input, shape index: {}]
  %s7 = inlined_call_operand.hbm [shape: bf16[128,128], index: 7, kind: input, shape index: {}]
  %s8 = inlined_call_operand.vmem [shape: f32[1,128], index: 8, kind: input, shape index: {}]
  %s9 = inlined_call_operand.vmem [shape: f32[8,2], index: 9, kind: output, shape index: {}]
  %s10 = sld [smem:[#allocation0]]
  $region54: #{classifier_mlp_forward.1} parent=0
    _
  %s12 = ssub.s32 1, %s10
  %s13 = scalar_select 0, %s12, %s10
  $region1: #{classifier_mlp_forward.1} parent=0
    #allocation2 [shape = 'u8[32768]{0}', space=vmem, size = 0x8000, scoped, tag = 'input window, operand 5, single buffered']
    #allocation3 [shape = 's32[1]{0}', space=sflag, size = 0x4, scoped, tag = 'scoped memory for classifier_mlp_forward.1']
    #allocation4 [shape = 'u8[32768]{0}', space=vmem, size = 0x8000, scoped, tag = 'input window, operand 7, single buffered']
    #allocation5 [shape = 's32[1]{0}', space=sflag, size = 0x4, scoped, tag = 'scoped memory for classifier_mlp_forward.1']
    %14 = vsyncpa [#allocation3], 0
    %15 = vsyncpa [#allocation5], 0
    // Predicated region
    $region2: #{classifier_mlp_forward.1} parent=1 // pred_check
      _
    $region3: #{classifier_mlp_forward.1} parent=1 // pred_check_branch
      %17 = sbr.rel (0) target = $region5
    $region4: #{classifier_mlp_forward.1} parent=1 // pred_region
      _
    $region5: #{classifier_mlp_forward.1} parent=1 // pred_fallthru
      _
    // Predicated region
    $region6: #{classifier_mlp_forward.1} parent=1 // pred_check
      _
    $region7: #{classifier_mlp_forward.1} parent=1 // pred_check_branch
      %19 = sbr.rel (0) target = $region9
    $region8: #{classifier_mlp_forward.1} parent=1 // pred_region
      _
    $region9: #{classifier_mlp_forward.1} parent=1 // pred_fallthru
      _
    // Predicated region
    $region10: #{classifier_mlp_forward.1} parent=1 // pred_check
      _
    $region11: #{classifier_mlp_forward.1} parent=1 // pred_check_branch
      %21 = sbr.rel (0) target = $region13
    $region12: #{classifier_mlp_forward.1} parent=1 // pred_region
      _
    $region13: #{classifier_mlp_forward.1} parent=1 // pred_fallthru
      _
    // Predicated region
    $region14: #{classifier_mlp_forward.1} parent=1 // pred_check
      _
    $region15: #{classifier_mlp_forward.1} parent=1 // pred_check_branch
      %23 = sbr.rel (0) target = $region17
    $region16: #{classifier_mlp_forward.1} parent=1 // pred_region
      _
    $region17: #{classifier_mlp_forward.1} parent=1 // pred_fallthru
      _
    // Predicated region
    $region18: #{classifier_mlp_forward.1} parent=1 // pred_check
      _
    $region19: #{classifier_mlp_forward.1} parent=1 // pred_check_branch
      %25 = sbr.rel (0) target = $region21
    $region20: #{classifier_mlp_forward.1} parent=1 // pred_region
      _
    $region21: #{classifier_mlp_forward.1} parent=1 // pred_fallthru
      _
    // Predicated region
    $region22: #{classifier_mlp_forward.1} parent=1 // pred_check
      _
    $region23: #{classifier_mlp_forward.1} parent=1 // pred_check_branch
      %27 = sbr.rel (0) target = $region25
    $region24: #{classifier_mlp_forward.1} parent=1 // pred_region
      %s29 = ssub.s32 1024, 1024
      %30 = vsyncadd [#allocation3], %s29
      %s31 = sshll.u32 [#allocation2], 4
      %s32 = int_to_ptr.vmem [resolvable:$true] %s31
      %37 = dma.hbm_to_vmem [thread:$0]  %s5, 1024, %s32, [#allocation3], 64, 64, 4
    $region25: #{classifier_mlp_forward.1} parent=1 // pred_fallthru
      _
    // Predicated region
    $region26: #{classifier_mlp_forward.1} parent=1 // pred_check
      _
    $region27: #{classifier_mlp_forward.1} parent=1 // pred_check_branch
      %39 = sbr.rel (0) target = $region29
    $region28: #{classifier_mlp_forward.1} parent=1 // pred_region
      _
    $region29: #{classifier_mlp_forward.1} parent=1 // pred_fallthru
      _
    // Predicated region
    $region30: #{classifier_mlp_forward.1} parent=1 // pred_check
      _
    $region31: #{classifier_mlp_forward.1} parent=1 // pred_check_branch
      %41 = sbr.rel (0) target = $region33
    $region32: #{classifier_mlp_forward.1} parent=1 // pred_region
      %s43 = ssub.s32 1024, 1024
      %44 = vsyncadd [#allocation5], %s43
      %s45 = sshll.u32 [#allocation4], 4
      %s46 = int_to_ptr.vmem [resolvable:$true] %s45
      %51 = dma.hbm_to_vmem [thread:$0]  %s7, 1024, %s46, [#allocation5], 64, 64, 4
    $region33: #{classifier_mlp_forward.1} parent=1 // pred_fallthru
      _
    // Predicated region
    $region34: #{classifier_mlp_forward.1} parent=1 // pred_check
      _
    $region35: #{classifier_mlp_forward.1} parent=1 // pred_check_branch
      %53 = sbr.rel (0) target = $region37
    $region36: #{classifier_mlp_forward.1} parent=1 // pred_region
      _
    $region37: #{classifier_mlp_forward.1} parent=1 // pred_fallthru
      _
    // Predicated region
    $region38: #{classifier_mlp_forward.1} parent=1 // pred_check
      _
    $region39: #{classifier_mlp_forward.1} parent=1 // pred_check_branch
      %55 = sbr.rel (0) target = $region41
    $region40: #{classifier_mlp_forward.1} parent=1 // pred_region
      %56 = dma.done [#allocation3], 1024
    $region41: #{classifier_mlp_forward.1} parent=1 // pred_fallthru
      _
    // Predicated region
    $region42: #{classifier_mlp_forward.1} parent=1 // pred_check
      _
    $region43: #{classifier_mlp_forward.1} parent=1 // pred_check_branch
      %58 = sbr.rel (0) target = $region45
    $region44: #{classifier_mlp_forward.1} parent=1 // pred_region
      %59 = dma.done [#allocation5], 1024
    $region45: #{classifier_mlp_forward.1} parent=1 // pred_fallthru
      _
    %v61 = vld [vmem:[%s0] sm:$0xff]
    %v62 = vld [vmem:[%s1] sm:$0xff]
    %v63 = vld [vmem:[%s2] sm:$0x1]
    %65 = vset.pattern.permute.xlu0 0
    %66 = vperm.xlu0 %65, %v61
    %v67 = vpop.permute.xlu0 %66
    %v69 = vlaneseq
    %v70 = vshrl.u32 %v69, 7
    %v71 = vsub.s32 0, %v70
    %v72 = vrot.slane %v63, %v71
    %v73 = vmul.f32 %v67, %v72
    %v74 = vld [vmem:[%s2 + $0x1] sm:$0x1]
    %75 = vset.pattern.permute.xlu0 1
    %76 = vperm.xlu0 %75, %v61
    %v77 = vpop.permute.xlu0 %76
    %v79 = vlaneseq
    %v80 = vshrl.u32 %v79, 7
    %v81 = vsub.s32 0, %v80
    %v82 = vrot.slane %v74, %v81
    %v83 = vmul.f32 %v77, %v82
    %v84 = vadd.f32 %v73, %v83
    %v85 = vld [vmem:[%s3] sm:$0x1]
    %87 = vset.pattern.permute.xlu0 0
    %88 = vperm.xlu0 %87, %v62
    %v89 = vpop.permute.xlu0 %88
    %v91 = vlaneseq
    %v92 = vshrl.u32 %v91, 7
    %v93 = vsub.s32 0, %v92
    %v94 = vrot.slane %v85, %v93
    %v95 = vmul.f32 %v89, %v94
    %v96 = vadd.f32 %v84, %v95
    %v97 = vld [vmem:[%s3 + $0x1] sm:$0x1]
    %98 = vset.pattern.permute.xlu0 1
    %99 = vperm.xlu0 %98, %v62
    %v100 = vpop.permute.xlu0 %99
    %v102 = vlaneseq
    %v103 = vshrl.u32 %v102, 7
    %v104 = vsub.s32 0, %v103
    %v105 = vrot.slane %v97, %v104
    %v106 = vmul.f32 %v100, %v105
    %v107 = vadd.f32 %v96, %v106
    %v108 = vld [vmem:[%s4] sm:$0x1]
    %v110 = vlaneseq
    %v111 = vshrl.u32 %v110, 7
    %v112 = vsub.s32 0, %v111
    %v113 = vrot.slane %v108, %v112
    %v115 = vadd.f32 %v107, %v113
    %v116 = vmax.f32 %v115, 0.0
    %v117 = vpack.c.bf16 %v116, %v116
    %v118 = vld [vmem:[#allocation2] sm:$0xf]
    %v119 = vld [vmem:[#allocation2 + $0x4] sm:$0xf]
    %v120 = vld [vmem:[#allocation2 + $0x8] sm:$0xf]
    %v121 = vld [vmem:[#allocation2 + $0xc] sm:$0xf]
    %v122 = vld [vmem:[#allocation2 + $0x10] sm:$0xf]
    %v123 = vld [vmem:[#allocation2 + $0x14] sm:$0xf]
    %v124 = vld [vmem:[#allocation2 + $0x18] sm:$0xf]
    %v125 = vld [vmem:[#allocation2 + $0x1c] sm:$0xf]
    %v126 = vld [vmem:[#allocation2 + $0x20] sm:$0xf]
    %v127 = vld [vmem:[#allocation2 + $0x24] sm:$0xf]
    %v128 = vld [vmem:[#allocation2 + $0x28] sm:$0xf]
    %v129 = vld [vmem:[#allocation2 + $0x2c] sm:$0xf]
    %v130 = vld [vmem:[#allocation2 + $0x30] sm:$0xf]
    %v131 = vld [vmem:[#allocation2 + $0x34] sm:$0xf]
    %v132 = vld [vmem:[#allocation2 + $0x38] sm:$0xf]
    %v133 = vld [vmem:[#allocation2 + $0x3c] sm:$0xf]
    %v134 = vld [vmem:[%s6] sm:$0x1]
    %v136 = vlaneseq
    %v137 = vshrl.u32 %v136, 7
    %v138 = vsub.s32 0, %v137
    %v139 = vrot.slane %v134, %v138
    %v157 = vunpack.c.l.b16 %v118
    %v158 = vunpack.c.l.b16 %v119
    %v159 = vunpack.c.l.b16 %v120
    %v160 = vunpack.c.l.b16 %v121
    %v161 = vunpack.c.l.b16 %v122
    %v162 = vunpack.c.l.b16 %v123
    %v163 = vunpack.c.l.b16 %v124
    %v164 = vunpack.c.l.b16 %v125
    %v165 = vunpack.c.l.b16 %v126
    %v166 = vunpack.c.l.b16 %v127
    %v167 = vunpack.c.l.b16 %v128
    %v168 = vunpack.c.l.b16 %v129
    %v169 = vunpack.c.l.b16 %v130
    %v170 = vunpack.c.l.b16 %v131
    %v171 = vunpack.c.l.b16 %v132
    %v172 = vunpack.c.l.b16 %v133
    %v173 = vpack.c.b16 %v158, %v157
    %v174 = vpack.c.b16 %v160, %v159
    %v175 = vpack.c.b16 %v162, %v161
    %v176 = vpack.c.b16 %v164, %v163
    %v177 = vpack.c.b16 %v166, %v165
    %v178 = vpack.c.b16 %v168, %v167
    %v179 = vpack.c.b16 %v170, %v169
    %v180 = vpack.c.b16 %v172, %v171
    %189 = vmatprep.subr.bf16.mxu0 0
    %190 = vmatpush1.bf16.msra.mxu0 %v173
    %191 = vmatprep.subr.bf16.mxu0 0
    %192 = vmatpush1.bf16.msra.mxu0 %v174
    %193 = vmatprep.subr.bf16.mxu0 0
    %194 = vmatpush1.bf16.msra.mxu0 %v175
    %195 = vmatprep.subr.bf16.mxu0 0
    %196 = vmatpush1.bf16.msra.mxu0 %v176
    %197 = vmatprep.subr.bf16.mxu0 0
    %198 = vmatpush1.bf16.msra.mxu0 %v177
    %199 = vmatprep.subr.bf16.mxu0 0
    %200 = vmatpush1.bf16.msra.mxu0 %v178
    %201 = vmatprep.subr.bf16.mxu0 0
    %202 = vmatpush1.bf16.msra.mxu0 %v179
    %203 = vmatprep.subr.bf16.mxu0 0
    %204 = vmatpush1.bf16.msra.mxu0 %v180
    %205 = vmatprep.subr.bf16.mxu0 0
    %206 = vmatpush1.bf16.msra.mxu0 0
    %207 = vmatprep.subr.bf16.mxu0 0
    %208 = vmatpush1.bf16.msra.mxu0 0
    %209 = vmatprep.subr.bf16.mxu0 0
    %210 = vmatpush1.bf16.msra.mxu0 0
    %211 = vmatprep.subr.bf16.mxu0 0
    %212 = vmatpush1.bf16.msra.mxu0 0
    %213 = vmatprep.subr.bf16.mxu0 0
    %214 = vmatpush1.bf16.msra.mxu0 0
    %215 = vmatprep.subr.bf16.mxu0 0
    %216 = vmatpush1.bf16.msra.mxu0 0
    %217 = vmatprep.subr.bf16.mxu0 0
    %218 = vmatpush1.bf16.msra.mxu0 0
    %219 = vmatprep.subr.bf16.mxu0 0
    %220 = vmatpush1.bf16.msra.mxu0 0
    %221 = vmatprep.mubr.bf16.mxu0 0
    %222 = vmatmul.mubr.bf16.gmra.mrb[0].mxu0 %v117
    %v223 = vpop.f32.mrb[0].mxu0
    %v224 = vadd.f32 %v139, %v223
    %v225 = vpop.f32.mrb[0].mxu0
    %v226 = vpop.f32.mrb[0].mxu0
    %v227 = vpop.f32.mrb[0].mxu0
    %228 = vdwg.mxu0
    %v229 = vmax.f32 %v224, 0.0
    %v230 = vpack.c.bf16 %v229, %v229
    %v231 = vld [vmem:[#allocation4] sm:$0xf]
    %v232 = vld [vmem:[#allocation4 + $0x4] sm:$0xf]
    %v233 = vld [vmem:[#allocation4 + $0x8] sm:$0xf]
    %v234 = vld [vmem:[#allocation4 + $0xc] sm:$0xf]
    %v235 = vld [vmem:[#allocation4 + $0x10] sm:$0xf]
    %v236 = vld [vmem:[#allocation4 + $0x14] sm:$0xf]
    %v237 = vld [vmem:[#allocation4 + $0x18] sm:$0xf]
    %v238 = vld [vmem:[#allocation4 + $0x1c] sm:$0xf]
    %v239 = vld [vmem:[#allocation4 + $0x20] sm:$0xf]
    %v240 = vld [vmem:[#allocation4 + $0x24] sm:$0xf]
    %v241 = vld [vmem:[#allocation4 + $0x28] sm:$0xf]
    %v242 = vld [vmem:[#allocation4 + $0x2c] sm:$0xf]
    %v243 = vld [vmem:[#allocation4 + $0x30] sm:$0xf]
    %v244 = vld [vmem:[#allocation4 + $0x34] sm:$0xf]
    %v245 = vld [vmem:[#allocation4 + $0x38] sm:$0xf]
    %v246 = vld [vmem:[#allocation4 + $0x3c] sm:$0xf]
    %v247 = vld [vmem:[%s8] sm:$0x1]
    %v249 = vlaneseq
    %v250 = vshrl.u32 %v249, 7
    %v251 = vsub.s32 0, %v250
    %v252 = vrot.slane %v247, %v251
    %v270 = vunpack.c.l.b16 %v231
    %v271 = vunpack.c.l.b16 %v232
    %v272 = vunpack.c.l.b16 %v233
    %v273 = vunpack.c.l.b16 %v234
    %v274 = vunpack.c.l.b16 %v235
    %v275 = vunpack.c.l.b16 %v236
    %v276 = vunpack.c.l.b16 %v237
    %v277 = vunpack.c.l.b16 %v238
    %v278 = vunpack.c.l.b16 %v239
    %v279 = vunpack.c.l.b16 %v240
    %v280 = vunpack.c.l.b16 %v241
    %v281 = vunpack.c.l.b16 %v242
    %v282 = vunpack.c.l.b16 %v243
    %v283 = vunpack.c.l.b16 %v244
    %v284 = vunpack.c.l.b16 %v245
    %v285 = vunpack.c.l.b16 %v246
    %v286 = vpack.c.b16 %v271, %v270
    %v287 = vpack.c.b16 %v273, %v272
    %v288 = vpack.c.b16 %v275, %v274
    %v289 = vpack.c.b16 %v277, %v276
    %v290 = vpack.c.b16 %v279, %v278
    %v291 = vpack.c.b16 %v281, %v280
    %v292 = vpack.c.b16 %v283, %v282
    %v293 = vpack.c.b16 %v285, %v284
    %302 = vmatprep.subr.bf16.mxu0 0
    %303 = vmatpush1.bf16.msra.mxu0 %v286
    %304 = vmatprep.subr.bf16.mxu0 0
    %305 = vmatpush1.bf16.msra.mxu0 %v287
    %306 = vmatprep.subr.bf16.mxu0 0
    %307 = vmatpush1.bf16.msra.mxu0 %v288
    %308 = vmatprep.subr.bf16.mxu0 0
    %309 = vmatpush1.bf16.msra.mxu0 %v289
    %310 = vmatprep.subr.bf16.mxu0 0
    %311 = vmatpush1.bf16.msra.mxu0 %v290
    %312 = vmatprep.subr.bf16.mxu0 0
    %313 = vmatpush1.bf16.msra.mxu0 %v291
    %314 = vmatprep.subr.bf16.mxu0 0
    %315 = vmatpush1.bf16.msra.mxu0 %v292
    %316 = vmatprep.subr.bf16.mxu0 0
    %317 = vmatpush1.bf16.msra.mxu0 %v293
    %318 = vmatprep.subr.bf16.mxu0 0
    %319 = vmatpush1.bf16.msra.mxu0 0
    %320 = vmatprep.subr.bf16.mxu0 0
    %321 = vmatpush1.bf16.msra.mxu0 0
    %322 = vmatprep.subr.bf16.mxu0 0
    %323 = vmatpush1.bf16.msra.mxu0 0
    %324 = vmatprep.subr.bf16.mxu0 0
    %325 = vmatpush1.bf16.msra.mxu0 0
    %326 = vmatprep.subr.bf16.mxu0 0
    %327 = vmatpush1.bf16.msra.mxu0 0
    %328 = vmatprep.subr.bf16.mxu0 0
    %329 = vmatpush1.bf16.msra.mxu0 0
    %330 = vmatprep.subr.bf16.mxu0 0
    %331 = vmatpush1.bf16.msra.mxu0 0
    %332 = vmatprep.subr.bf16.mxu0 0
    %333 = vmatpush1.bf16.msra.mxu0 0
    %334 = vmatprep.mubr.bf16.mxu0 0
    %335 = vmatmul.mubr.bf16.gmra.mrb[0].mxu0 %v230
    %v336 = vpop.f32.mrb[0].mxu0
    %v337 = vadd.f32 %v252, %v336
    %v338 = vpop.f32.mrb[0].mxu0
    %v339 = vpop.f32.mrb[0].mxu0
    %v340 = vpop.f32.mrb[0].mxu0
    %341 = vdwg.mxu0
    %vm342 = vcmask 15360
    %343 = vst.msk [vmem:[%s9] sm:$0xff] %vm342, %v337
    // Predicated region
    $region46: #{classifier_mlp_forward.1} parent=1 // pred_check
      _
    $region47: #{classifier_mlp_forward.1} parent=1 // pred_check_branch
      %345 = sbr.rel (0) target = $region49
    $region48: #{classifier_mlp_forward.1} parent=1 // pred_region
      _
    $region49: #{classifier_mlp_forward.1} parent=1 // pred_fallthru
      _
    // Predicated region
    $region50: #{classifier_mlp_forward.1} parent=1 // pred_check
      _
    $region51: #{classifier_mlp_forward.1} parent=1 // pred_check_branch
      %347 = sbr.rel (0) target = $region53
    $region52: #{classifier_mlp_forward.1} parent=1 // pred_region
      _
    $region53: #{classifier_mlp_forward.1} parent=1 // pred_fallthru
      _
    %348 = vsyncpa [#allocation3], 1
    %349 = vsyncpa [#allocation5], 1

</llo_original>
